<compile_context>
chip_gen: v6e
topology: v6e:2x2x1
jax: 0.10.0
libtpu: 0.0.40
codegen_flags: <defaults>
</compile_context>

<pallas_src>
import jax
import jax.numpy as jnp
from jax.experimental import pallas as pl
from jax.experimental.pallas import tpu as pltpu

_LANE_WIDTH = 512                 # lane-dense slab width (multiple of 128)
_BLOCK_ROWS = 1024                # per-component rows/block -> 4 MiB per stacked buffer
_VMEM_LIMIT_BYTES = 40 * 1024 * 1024


def _cardioid_kernel(x_ref, o_ref):
    # x_ref / o_ref: (2, br, W) float32; index 0 = real part, 1 = imag part.
    xr = x_ref[0]
    xi = x_ref[1]
    # Real part first: only cos(xi) and sin(xr) are live across this store.
    o_ref[0] = xr * jnp.cos(xi) - xi * jnp.sin(xr)
    # Imag part second: sin(xi) / cos(xr) are computed after the first store,
    # halving simultaneously-live trig results per strip.
    o_ref[1] = xr * jnp.sin(xi) + xi * jnp.cos(xr)


def _cardioid_stacked(x2):
    """x2: (2, rows, W) float32 stacked [real; imag] -> same-shape float32."""
    _, rows, width = x2.shape
    br = min(_BLOCK_ROWS, rows)           # full dim if the array is small
    grid = (pl.cdiv(rows, br),)           # partial last block masked by Pallas
    spec = pl.BlockSpec((2, br, width), lambda i: (0, i, 0))
    return pl.pallas_call(
        _cardioid_kernel,
        out_shape=jax.ShapeDtypeStruct(x2.shape, jnp.float32),
        grid=grid,
        in_specs=[spec],
        out_specs=spec,
        compiler_params=pltpu.CompilerParams(
            dimension_semantics=("parallel",),   # shards rows across both TCs on v7x
            vmem_limit_bytes=_VMEM_LIMIT_BYTES,  # needed above v5e's 16 MiB default
        ),
    )(x2)


@jax.jit
def cardioid_split(x_real, x_imag):
    """Split-API path: float32 real/imag in -> float32 real/imag out.

    This is the efficient end-to-end entry point if the caller already holds
    split real/imag tensors (avoids the complex<->split HBM passes of
    `cardioid`).
    """
    orig_shape = x_real.shape
    xr = x_real.astype(jnp.float32).reshape(-1)
    xi = x_imag.astype(jnp.float32).reshape(-1)

    n = xr.shape[0]
    # Pad flat length to a multiple of the lane width (often a no-op); the
    # pad region computes sin/cos of 0 and is sliced off afterwards.
    n_pad = pl.cdiv(n, _LANE_WIDTH) * _LANE_WIDTH
    if n_pad != n:
        xr = jnp.pad(xr, (0, n_pad - n))
        xi = jnp.pad(xi, (0, n_pad - n))

    rows = n_pad // _LANE_WIDTH
    x2 = jnp.stack(
        [xr.reshape(rows, _LANE_WIDTH), xi.reshape(rows, _LANE_WIDTH)], axis=0
    )
    o2 = _cardioid_stacked(x2)

    out_r = o2[0].reshape(-1)[:n].reshape(orig_shape)
    out_i = o2[1].reshape(-1)[:n].reshape(orig_shape)
    return out_r, out_i


@jax.jit
def cardioid(x):
    """PyTorch-compatible path: complex input of any shape -> complex64."""
    out_r, out_i = cardioid_split(jnp.real(x), jnp.imag(x))
    return jax.lax.complex(out_r, out_i)


def _cardioid_ref(x):
    xr = jnp.real(x).astype(jnp.float32)
    xi = jnp.imag(x).astype(jnp.float32)
    re = xr * jnp.cos(xi) - xi * jnp.sin(xr)
    im = xr * jnp.sin(xi) + xi * jnp.cos(xr)
    return jax.lax.complex(re, im)


if __name__ == "__main__":
    key = jax.random.PRNGKey(0)
    kr, ki = jax.random.split(key)
    shape = (2, 4, 16, 16)  # NCHW, small
    x_real = jax.random.normal(kr, shape, dtype=jnp.float32)
    x_imag = jax.random.normal(ki, shape, dtype=jnp.float32)
    x = jax.lax.complex(x_real, x_imag)  # complex64

    out = cardioid(x)
    out = jax.block_until_ready(out)

    ref = _cardioid_ref(x)
    assert out.shape == shape and out.dtype == jnp.complex64
    assert jnp.allclose(out, ref, atol=1e-5, rtol=1e-5)
    print("KERNEL_OK")
</pallas_src>

<mosaic_0001>
module attributes {stable_mosaic.version = 11 : i64} {
  func.func @_cardioid_kernel(%arg0: i32, %arg1: memref<2x4x512xf32, #tpu.memory_space<vmem>>, %arg2: memref<2x4x512xf32, #tpu.memory_space<vmem>>) attributes {dimension_semantics = [#tpu.dimension_semantics<parallel>], iteration_bounds = array<i64: 1>, scalar_prefetch = 0 : i64, scratch_operands = 0 : i64, tpu.core_type = #tpu.core_type<tc>, window_params = [{transform_indices = @transform_0, window_bounds = array<i64: 2, 4, 512>}, {transform_indices = @transform_1, window_bounds = array<i64: 2, 4, 512>}]} {
    %c0 = arith.constant 0 : index
    %c0_0 = arith.constant 0 : index
    %c0_1 = arith.constant 0 : index
    %0 = vector.load %arg1[%c0, %c0_0, %c0_1] : memref<2x4x512xf32, #tpu.memory_space<vmem>>, vector<1x4x512xf32>
    %1 = vector.shape_cast %0 : vector<1x4x512xf32> to vector<4x512xf32>
    %c1 = arith.constant 1 : index
    %c0_2 = arith.constant 0 : index
    %c0_3 = arith.constant 0 : index
    %2 = vector.load %arg1[%c1, %c0_2, %c0_3] : memref<2x4x512xf32, #tpu.memory_space<vmem>>, vector<1x4x512xf32>
    %3 = vector.shape_cast %2 : vector<1x4x512xf32> to vector<4x512xf32>
    %4 = math.cos %3 : vector<4x512xf32>
    %5 = arith.mulf %1, %4 : vector<4x512xf32>
    %6 = math.sin %1 : vector<4x512xf32>
    %7 = arith.mulf %3, %6 : vector<4x512xf32>
    %8 = arith.subf %5, %7 : vector<4x512xf32>
    %c0_4 = arith.constant 0 : index
    %c0_5 = arith.constant 0 : index
    %c0_6 = arith.constant 0 : index
    %9 = vector.load %arg2[%c0_4, %c0_5, %c0_6] : memref<2x4x512xf32, #tpu.memory_space<vmem>>, vector<1x4x512xf32>
    %10 = vector.shape_cast %9 : vector<1x4x512xf32> to vector<4x512xf32>
    %11 = vector.shape_cast %8 : vector<4x512xf32> to vector<1x4x512xf32>
    tpu.vector_store %arg2[%c0_4, %c0_5, %c0_6], %11 {strides = array<i32>} : memref<2x4x512xf32, #tpu.memory_space<vmem>>, vector<1x4x512xf32>,
    %12 = math.sin %3 : vector<4x512xf32>
    %13 = arith.mulf %1, %12 : vector<4x512xf32>
    %14 = math.cos %1 : vector<4x512xf32>
    %15 = arith.mulf %3, %14 : vector<4x512xf32>
    %16 = arith.addf %13, %15 : vector<4x512xf32>
    %c1_7 = arith.constant 1 : index
    %c0_8 = arith.constant 0 : index
    %c0_9 = arith.constant 0 : index
    %17 = vector.load %arg2[%c1_7, %c0_8, %c0_9] : memref<2x4x512xf32, #tpu.memory_space<vmem>>, vector<1x4x512xf32>
    %18 = vector.shape_cast %17 : vector<1x4x512xf32> to vector<4x512xf32>
    %19 = vector.shape_cast %16 : vector<4x512xf32> to vector<1x4x512xf32>
    tpu.vector_store %arg2[%c1_7, %c0_8, %c0_9], %19 {strides = array<i32>} : memref<2x4x512xf32, #tpu.memory_space<vmem>>, vector<1x4x512xf32>,
    return
  }
  func.func @transform_0(%arg0: i32) -> (i32, i32, i32) {
    %c0_i32 = arith.constant 0 : i32
    %c0_i32_0 = arith.constant 0 : i32
    %c0_i32_1 = arith.constant 0 : i32
    return %c0_i32, %arg0, %c0_i32_0 : i32, i32, i32
  }
  func.func @transform_1(%arg0: i32) -> (i32, i32, i32) {
    %c0_i32 = arith.constant 0 : i32
    %c0_i32_0 = arith.constant 0 : i32
    %c0_i32_1 = arith.constant 0 : i32
    return %c0_i32, %arg0, %c0_i32_0 : i32, i32, i32
  }
}

</mosaic_0001>

<llo_original>
// kernel: squeeze.3
$region0: #{squeeze.3}
  %s0 = inlined_call_operand.vmem [shape: f32[1,4,512], index: 0, kind: input, shape index: {}]
  %s1 = inlined_call_operand.hbm [shape: f32[2,4,16,16], index: 1, kind: output, shape index: {}]
  $region1: #{squeeze.3} parent=0
    #allocation0 [shape = 'u8[65536]{0}', space=vmem, size = 0x10000, scoped, tag = 'operand span for operand 1']
    #allocation1 [shape = 's32[1]{0}', space=sflag, size = 0x4, scoped, tag = 'scoped memory for squeeze.3']
    #allocation2 [shape = 'u8[16384]{0}', space=vmem, size = 0x4000, scoped, tag = 'scoped mem for input reshape']
    %2 = vsyncpa [#allocation1], 0
    %s4 = sshll.u32 1, 4
    %s5 = ssub.s32 %s4, 1
    %s6 = smul.addr 4, 3
    %s7 = scalar_lea.vmem %s0, %s6
    %v8 = vld [vmem:[%s7] sm:%s5]
    %s9 = scalar_lea.vmem [#allocation2], 24
    %10 = vst [vmem:[%s9] sm:%s5] %v8
    %s11 = smul.addr 4, 2
    %s12 = scalar_lea.vmem %s0, %s11
    %v13 = vld [vmem:[%s12] sm:%s5]
    %s14 = scalar_lea.vmem [#allocation2], 16
    %15 = vst [vmem:[%s14] sm:%s5] %v13
    %s16 = scalar_lea.vmem %s0, 4
    %v17 = vld [vmem:[%s16] sm:%s5]
    %s18 = scalar_lea.vmem [#allocation2], 8
    %19 = vst [vmem:[%s18] sm:%s5] %v17
    %v20 = vld [vmem:[%s0] sm:%s5]
    %21 = vst [vmem:[#allocation2] sm:%s5] %v20
    %v22 = vld [vmem:[#allocation2] sm:$0xf]
    %vm23 = vcmask 130048
    %24 = vst.msk [vmem:[#allocation0] sm:$0x1] %vm23, %v22
    %s25 = scalar_lea.vmem [#allocation0], 31
    %26 = vst.msk [vmem:[%s25] sm:$0x2] %vm23, %v22
    %s27 = scalar_lea.vmem [#allocation0], 62
    %28 = vst.msk [vmem:[%s27] sm:$0x4] %vm23, %v22
    %s29 = scalar_lea.vmem [#allocation0], 93
    %30 = vst.msk [vmem:[%s29] sm:$0x8] %vm23, %v22
    %s31 = scalar_lea.vmem [#allocation2], 8
    %v32 = vld [vmem:[%s31] sm:$0xf]
    %vm33 = vcmask 130048
    %s34 = scalar_lea.vmem [#allocation0], 8
    %35 = vst.msk [vmem:[%s34] sm:$0x1] %vm33, %v32
    %s36 = scalar_lea.vmem [#allocation0], 39
    %37 = vst.msk [vmem:[%s36] sm:$0x2] %vm33, %v32
    %s38 = scalar_lea.vmem [#allocation0], 70
    %39 = vst.msk [vmem:[%s38] sm:$0x4] %vm33, %v32
    %s40 = scalar_lea.vmem [#allocation0], 101
    %41 = vst.msk [vmem:[%s40] sm:$0x8] %vm33, %v32
    %s42 = scalar_lea.vmem [#allocation2], 16
    %v43 = vld [vmem:[%s42] sm:$0xf]
    %vm44 = vcmask 130048
    %s45 = scalar_lea.vmem [#allocation0], 16
    %46 = vst.msk [vmem:[%s45] sm:$0x1] %vm44, %v43
    %s47 = scalar_lea.vmem [#allocation0], 47
    %48 = vst.msk [vmem:[%s47] sm:$0x2] %vm44, %v43
    %s49 = scalar_lea.vmem [#allocation0], 78
    %50 = vst.msk [vmem:[%s49] sm:$0x4] %vm44, %v43
    %s51 = scalar_lea.vmem [#allocation0], 109
    %52 = vst.msk [vmem:[%s51] sm:$0x8] %vm44, %v43
    %s53 = scalar_lea.vmem [#allocation2], 24
    %v54 = vld [vmem:[%s53] sm:$0xf]
    %vm55 = vcmask 130048
    %s56 = scalar_lea.vmem [#allocation0], 24
    %57 = vst.msk [vmem:[%s56] sm:$0x1] %vm55, %v54
    %s58 = scalar_lea.vmem [#allocation0], 55
    %59 = vst.msk [vmem:[%s58] sm:$0x2] %vm55, %v54
    %s60 = scalar_lea.vmem [#allocation0], 86
    %61 = vst.msk [vmem:[%s60] sm:$0x4] %vm55, %v54
    %s62 = scalar_lea.vmem [#allocation0], 117
    %63 = vst.msk [vmem:[%s62] sm:$0x8] %vm55, %v54
    %v64 = vld [vmem:[#allocation2] ss:$8 sm:$0xf]
    %s65 = scalar_lea.vmem [#allocation2], 4294967265
    %v66 = vld [vmem:[%s65] ss:$8 sm:$0xf0]
    %vm67 = vcmask 1047556
    %v68 = vsel %vm67, %v66, %v64
    %69 = vrot.lane.b32.xlu0 %v68, 112
    %v70 = vpop.permute.xlu0 %69
    %vm71 = vcmask 130048
    %s72 = scalar_lea.vmem [#allocation0], 1
    %73 = vst.msk [vmem:[%s72] ss:$8 sm:$0xf] %vm71, %v70
    %s74 = scalar_lea.vmem [#allocation0], 1
    %75 = vst.msk [vmem:[%s74] ss:$8 sm:$0xf0] %vm71, %v70
    %s76 = scalar_lea.vmem [#allocation2], 2
    %v77 = vld [vmem:[%s76] ss:$8 sm:$0xf]
    %s78 = scalar_lea.vmem [#allocation2], 4294967267
    %v79 = vld [vmem:[%s78] ss:$8 sm:$0xf0]
    %vm80 = vcmask 1047556
    %v81 = vsel %vm80, %v79, %v77
    %82 = vrot.lane.b32.xlu0 %v81, 112
    %v83 = vpop.permute.xlu0 %82
    %vm84 = vcmask 130048
    %s85 = scalar_lea.vmem [#allocation0], 65
    %86 = vst.msk [vmem:[%s85] ss:$8 sm:$0xf] %vm84, %v83
    %s87 = scalar_lea.vmem [#allocation0], 65
    %88 = vst.msk [vmem:[%s87] ss:$8 sm:$0xf0] %vm84, %v83
    %v89 = vld [vmem:[#allocation2] ss:$8 sm:$0xf]
    %s90 = scalar_lea.vmem [#allocation2], 4294967265
    %v91 = vld [vmem:[%s90] ss:$8 sm:$0xf0]
    %vm92 = vcmask 1047556
    %v93 = vsel %vm92, %v91, %v89
    %94 = vrot.lane.b32.xlu0 %v93, 96
    %v95 = vpop.permute.xlu0 %94
    %vm96 = vcmask 130048
    %s97 = scalar_lea.vmem [#allocation0], 2
    %98 = vst.msk [vmem:[%s97] ss:$8 sm:$0xf] %vm96, %v95
    %s99 = scalar_lea.vmem [#allocation0], 2
    %100 = vst.msk [vmem:[%s99] ss:$8 sm:$0xf0] %vm96, %v95
    %s101 = scalar_lea.vmem [#allocation2], 2
    %v102 = vld [vmem:[%s101] ss:$8 sm:$0xf]
    %s103 = scalar_lea.vmem [#allocation2], 4294967267
    %v104 = vld [vmem:[%s103] ss:$8 sm:$0xf0]
    %vm105 = vcmask 1047556
    %v106 = vsel %vm105, %v104, %v102
    %107 = vrot.lane.b32.xlu0 %v106, 96
    %v108 = vpop.permute.xlu0 %107
    %vm109 = vcmask 130048
    %s110 = scalar_lea.vmem [#allocation0], 66
    %111 = vst.msk [vmem:[%s110] ss:$8 sm:$0xf] %vm109, %v108
    %s112 = scalar_lea.vmem [#allocation0], 66
    %113 = vst.msk [vmem:[%s112] ss:$8 sm:$0xf0] %vm109, %v108
    %v114 = vld [vmem:[#allocation2] ss:$8 sm:$0xf]
    %s115 = scalar_lea.vmem [#allocation2], 4294967265
    %v116 = vld [vmem:[%s115] ss:$8 sm:$0xf0]
    %vm117 = vcmask 1047556
    %v118 = vsel %vm117, %v116, %v114
    %119 = vrot.lane.b32.xlu0 %v118, 80
    %v120 = vpop.permute.xlu0 %119
    %vm121 = vcmask 130048
    %s122 = scalar_lea.vmem [#allocation0], 3
    %123 = vst.msk [vmem:[%s122] ss:$8 sm:$0xf] %vm121, %v120
    %s124 = scalar_lea.vmem [#allocation0], 3
    %125 = vst.msk [vmem:[%s124] ss:$8 sm:$0xf0] %vm121, %v120
    %s126 = scalar_lea.vmem [#allocation2], 2
    %v127 = vld [vmem:[%s126] ss:$8 sm:$0xf]
    %s128 = scalar_lea.vmem [#allocation2], 4294967267
    %v129 = vld [vmem:[%s128] ss:$8 sm:$0xf0]
    %vm130 = vcmask 1047556
    %v131 = vsel %vm130, %v129, %v127
    %132 = vrot.lane.b32.xlu0 %v131, 80
    %v133 = vpop.permute.xlu0 %132
    %vm134 = vcmask 130048
    %s135 = scalar_lea.vmem [#allocation0], 67
    %136 = vst.msk [vmem:[%s135] ss:$8 sm:$0xf] %vm134, %v133
    %s137 = scalar_lea.vmem [#allocation0], 67
    %138 = vst.msk [vmem:[%s137] ss:$8 sm:$0xf0] %vm134, %v133
    %v139 = vld [vmem:[#allocation2] ss:$8 sm:$0xf]
    %s140 = scalar_lea.vmem [#allocation2], 4294967265
    %v141 = vld [vmem:[%s140] ss:$8 sm:$0xf0]
    %vm142 = vcmask 1047556
    %v143 = vsel %vm142, %v141, %v139
    %144 = vrot.lane.b32.xlu0 %v143, 64
    %v145 = vpop.permute.xlu0 %144
    %vm146 = vcmask 130048
    %s147 = scalar_lea.vmem [#allocation0], 4
    %148 = vst.msk [vmem:[%s147] ss:$8 sm:$0xf] %vm146, %v145
    %s149 = scalar_lea.vmem [#allocation0], 4
    %150 = vst.msk [vmem:[%s149] ss:$8 sm:$0xf0] %vm146, %v145
    %s151 = scalar_lea.vmem [#allocation2], 2
    %v152 = vld [vmem:[%s151] ss:$8 sm:$0xf]
    %s153 = scalar_lea.vmem [#allocation2], 4294967267
    %v154 = vld [vmem:[%s153] ss:$8 sm:$0xf0]
    %vm155 = vcmask 1047556
    %v156 = vsel %vm155, %v154, %v152
    %157 = vrot.lane.b32.xlu0 %v156, 64
    %v158 = vpop.permute.xlu0 %157
    %vm159 = vcmask 130048
    %s160 = scalar_lea.vmem [#allocation0], 68
    %161 = vst.msk [vmem:[%s160] ss:$8 sm:$0xf] %vm159, %v158
    %s162 = scalar_lea.vmem [#allocation0], 68
    %163 = vst.msk [vmem:[%s162] ss:$8 sm:$0xf0] %vm159, %v158
    %v164 = vld [vmem:[#allocation2] ss:$8 sm:$0xf]
    %s165 = scalar_lea.vmem [#allocation2], 4294967265
    %v166 = vld [vmem:[%s165] ss:$8 sm:$0xf0]
    %vm167 = vcmask 1047556
    %v168 = vsel %vm167, %v166, %v164
    %169 = vrot.lane.b32.xlu0 %v168, 48
    %v170 = vpop.permute.xlu0 %169
    %vm171 = vcmask 130048
    %s172 = scalar_lea.vmem [#allocation0], 5
    %173 = vst.msk [vmem:[%s172] ss:$8 sm:$0xf] %vm171, %v170
    %s174 = scalar_lea.vmem [#allocation0], 5
    %175 = vst.msk [vmem:[%s174] ss:$8 sm:$0xf0] %vm171, %v170
    %s176 = scalar_lea.vmem [#allocation2], 2
    %v177 = vld [vmem:[%s176] ss:$8 sm:$0xf]
    %s178 = scalar_lea.vmem [#allocation2], 4294967267
    %v179 = vld [vmem:[%s178] ss:$8 sm:$0xf0]
    %vm180 = vcmask 1047556
    %v181 = vsel %vm180, %v179, %v177
    %182 = vrot.lane.b32.xlu0 %v181, 48
    %v183 = vpop.permute.xlu0 %182
    %vm184 = vcmask 130048
    %s185 = scalar_lea.vmem [#allocation0], 69
    %186 = vst.msk [vmem:[%s185] ss:$8 sm:$0xf] %vm184, %v183
    %s187 = scalar_lea.vmem [#allocation0], 69
    %188 = vst.msk [vmem:[%s187] ss:$8 sm:$0xf0] %vm184, %v183
    %v189 = vld [vmem:[#allocation2] ss:$8 sm:$0xf]
    %s190 = scalar_lea.vmem [#allocation2], 4294967265
    %v191 = vld [vmem:[%s190] ss:$8 sm:$0xf0]
    %vm192 = vcmask 1047556
    %v193 = vsel %vm192, %v191, %v189
    %194 = vrot.lane.b32.xlu0 %v193, 32
    %v195 = vpop.permute.xlu0 %194
    %vm196 = vcmask 130048
    %s197 = scalar_lea.vmem [#allocation0], 6
    %198 = vst.msk [vmem:[%s197] ss:$8 sm:$0xf] %vm196, %v195
    %s199 = scalar_lea.vmem [#allocation0], 6
    %200 = vst.msk [vmem:[%s199] ss:$8 sm:$0xf0] %vm196, %v195
    %s201 = scalar_lea.vmem [#allocation2], 2
    %v202 = vld [vmem:[%s201] ss:$8 sm:$0xf]
    %s203 = scalar_lea.vmem [#allocation2], 4294967267
    %v204 = vld [vmem:[%s203] ss:$8 sm:$0xf0]
    %vm205 = vcmask 1047556
    %v206 = vsel %vm205, %v204, %v202
    %207 = vrot.lane.b32.xlu0 %v206, 32
    %v208 = vpop.permute.xlu0 %207
    %vm209 = vcmask 130048
    %s210 = scalar_lea.vmem [#allocation0], 70
    %211 = vst.msk [vmem:[%s210] ss:$8 sm:$0xf] %vm209, %v208
    %s212 = scalar_lea.vmem [#allocation0], 70
    %213 = vst.msk [vmem:[%s212] ss:$8 sm:$0xf0] %vm209, %v208
    %v214 = vld [vmem:[#allocation2] ss:$8 sm:$0xf]
    %s215 = scalar_lea.vmem [#allocation2], 4294967265
    %v216 = vld [vmem:[%s215] ss:$8 sm:$0xf0]
    %vm217 = vcmask 1047556
    %v218 = vsel %vm217, %v216, %v214
    %219 = vrot.lane.b32.xlu0 %v218, 16
    %v220 = vpop.permute.xlu0 %219
    %vm221 = vcmask 130048
    %s222 = scalar_lea.vmem [#allocation0], 7
    %223 = vst.msk [vmem:[%s222] ss:$8 sm:$0xf] %vm221, %v220
    %s224 = scalar_lea.vmem [#allocation0], 7
    %225 = vst.msk [vmem:[%s224] ss:$8 sm:$0xf0] %vm221, %v220
    %s226 = scalar_lea.vmem [#allocation2], 2
    %v227 = vld [vmem:[%s226] ss:$8 sm:$0xf]
    %s228 = scalar_lea.vmem [#allocation2], 4294967267
    %v229 = vld [vmem:[%s228] ss:$8 sm:$0xf0]
    %vm230 = vcmask 1047556
    %v231 = vsel %vm230, %v229, %v227
    %232 = vrot.lane.b32.xlu0 %v231, 16
    %v233 = vpop.permute.xlu0 %232
    %vm234 = vcmask 130048
    %s235 = scalar_lea.vmem [#allocation0], 71
    %236 = vst.msk [vmem:[%s235] ss:$8 sm:$0xf] %vm234, %v233
    %s237 = scalar_lea.vmem [#allocation0], 71
    %238 = vst.msk [vmem:[%s237] ss:$8 sm:$0xf0] %vm234, %v233
    %s240 = ssub.s32 2048, 2048
    %241 = vsyncadd [#allocation1], %s240
    %s243 = sshll.u32 [#allocation0], 4
    %s244 = int_to_ptr.vmem [resolvable:$true] %s243
    %246 = dma.vmem_to_hbm [thread:$0]  %s244, 2048, %s1, [#allocation1]
    %247 = dma.done [#allocation1], 2048
    %248 = vsyncpa [#allocation1], 1

// kernel: cardioid_split.1
$region0: #{cardioid_split.1}
  #allocation0 [shape = 'u32[]', space=smem, size = 0x4, offset = 0x4, fixed_abs, tag = 'smem constant byte address 0x4 - core index']
  #allocation1 [shape = 'u32[144,128]{1,0:T(1,128)}', space=vmem, size = 0x12000, scoped, tag = 'internal scratch']
  %s0 = inlined_call_operand.vmem [shape: f32[2,4,512], index: 0, kind: input, shape index: {}]
  %s1 = inlined_call_operand.vmem [shape: f32[2,4,512], index: 1, kind: output, shape index: {}]
  %s2 = sld [smem:[#allocation0]]
  $region14: #{cardioid_split.1} parent=0
    _
  %s4 = ssub.s32 1, %s2
  %s5 = scalar_select 0, %s4, %s2
  // Predicated region
  $region2: #{cardioid_split.1} parent=0 // pred_check
    _
  $region3: #{cardioid_split.1} parent=0 // pred_check_branch
    %7 = sbr.rel (0) target = $region5
  $region4: #{cardioid_split.1} parent=0 // pred_region
    _
  $region5: #{cardioid_split.1} parent=0 // pred_fallthru
    _
  %v8 = vld [vmem:[%s0] sm:$0xff]
  %v9 = vld [vmem:[%s0 + $0x8] sm:$0xff]
  %s10 = scalar_lea.vmem %s0, 16
  %v11 = vld [vmem:[%s10] sm:$0xff]
  %v12 = vld [vmem:[%s10 + $0x8] sm:$0xff]
  %v13 = vand.u32 2147483647, %v11
  %vm14 = vcmp.le.f32.partialorder %v13, 0.7853982
  %vm15 = vcmp.lt.s32.totalorder %v11, 0
  %v16 = vand.u32 %v11, 2139095040
  %v17 = vshrl.u32 %v16, 23
  %v18 = vsub.s32 %v17, 127
  %v19 = vand.u32 2147483647, %v11
  %v20 = vand.u32 %v19, 8388607
  %v21 = vor.u32 %v20, 8388608
  %v22 = vsub.s32 0, %v21
  %v23 = vadd.s32 %v18, 1
  %vm24 = vcmp.gt.s32.totalorder %v23, 0
  %v25 = vsel %vm24, %v23, 0
  %v26 = vshrl.u32 %v25, 5
  %v27 = vand.u32 %v25, 31
  %v28 = vsub.s32 32, %v27
  %v29 = vshrl.u32 683565275, %v28
  %v30 = vshll.u32 683565275, %v27
  %v31 = vshrl.u32 2475754826, %v28
  %v32 = vor.u32 %v30, %v31
  %v33 = vshll.u32 2475754826, %v27
  %v34 = vshrl.u32 2131351028, %v28
  %v35 = vor.u32 %v33, %v34
  %v36 = vshll.u32 2131351028, %v27
  %v37 = vshrl.u32 2102212464, %v28
  %v38 = vor.u32 %v36, %v37
  %v39 = vshll.u32 2102212464, %v27
  %v40 = vshrl.u32 920167782, %v28
  %v41 = vor.u32 %v39, %v40
  %v42 = vshll.u32 920167782, %v27
  %v43 = vshrl.u32 1326507024, %v28
  %v44 = vor.u32 %v42, %v43
  %vm45 = vcmp.lt.s32.totalorder %v26, 1
  %vm46 = vcmp.lt.s32.totalorder %v26, 2
  %vm47 = vcmp.lt.s32.totalorder %v26, 3
  %vm48 = vcmp.lt.s32.totalorder %v26, 4
  %v49 = vsel %vm45, %v29, %v32
  %v50 = vsel %vm48, %v38, 2102212464
  %v51 = vsel %vm47, %v35, %v50
  %v52 = vsel %vm46, %v49, %v51
  %v53 = vsel %vm45, %v32, %v35
  %v54 = vsel %vm48, %v41, 920167782
  %v55 = vsel %vm47, %v38, %v54
  %v56 = vsel %vm46, %v53, %v55
  %v57 = vsel %vm45, %v35, %v38
  %v58 = vsel %vm48, %v44, 1326507024
  %v59 = vsel %vm47, %v41, %v58
  %v60 = vsel %vm46, %v57, %v59
  %v61 = vshll.u32 %v21, 8
  %v62 = vmul.u32.u64.compose %v61, %v60
  %v63 = vextract.low.u32 %v62
  %v64 = vextract.high.u32 %v62
  %v65 = vmul.u32.u64.compose %v61, %v56
  %v66 = vextract.low.u32 %v65
  %v67 = vextract.high.u32 %v65
  %v68 = vmul.u32 %v61, %v52
  %v69 = vadd.s32 %v64, %v66
  %vm70 = vc.u32 %v64, %v66
  %v71 = vadd.s32 %v67, 1
  %v72 = vsel %vm70, %v71, %v67
  %v73 = vadd.s32 %v68, %v72
  %v74 = vadd.s32 %v73, 536870912
  %v75 = vshrl.u32 %v74, 30
  %v76 = vshll.u32 %v75, 30
  %v77 = vsub.s32 %v73, %v76
  %vm78 = vcmp.lt.s32.totalorder %v77, 0
  %v79 = vsub.s32 0, %v77
  %v80 = vsel %vm78, %v79, %v77
  %v81 = vclz %v80
  %v82 = vsub.s32 %v81, 2
  %vm83 = vcmp.gt.s32.totalorder 0, %v82
  %v84 = vsel %vm83, 0, %v82
  %v85 = vsub.s32 32, %v84
  %v86 = vshll.u32 %v77, %v84
  %v87 = vshrl.u32 %v69, %v85
  %v88 = vor.u32 %v86, %v87
  %v89 = vsub.s32 4294967266, %v84
  %v90 = vadd.s32 %v89, 127
  %v91 = vshll.u32 %v90, 23
  %v92 = vor.u32 4788187, %v91
  %v93 = vand.u32 2147483647, %v92
  %v95 = vcvt.s32.f32 %v88
  %v96 = vmul.f32 %v95, %v93
  %v97 = vxor.u32 %v96, 2147483648
  %v98 = vsel %vm15, %v97, %v96
  %v99 = vsub.s32 4, %v75
  %v100 = vsel %vm15, %v99, %v75
  %v101 = vsel %vm14, %v11, %v98
  %v102 = vsel %vm14, 0, %v100
  %v103 = vcosq.f32.pop %v101
  %v104 = vsinq.f32.pop %v101
  %vm105 = vweird.f32 %v11
  %v106 = vand.u32 %v102, 3
  %vm107 = vcmp.lt.s32.totalorder %v106, 2
  %vm108 = vcmp.eq.s32.totalorder %v106, 0
  %v109 = vxor.u32 %v104, 2147483648
  %v110 = vsel %vm108, %v103, %v109
  %vm111 = vcmp.eq.s32.totalorder %v106, 2
  %v112 = vxor.u32 %v103, 2147483648
  %v113 = vsel %vm111, %v112, %v104
  %v114 = vsel %vm107, %v110, %v113
  %v115 = vsel %vm105, nan, %v114
  %v116 = vand.u32 2147483647, %v12
  %vm117 = vcmp.le.f32.partialorder %v116, 0.7853982
  %vm118 = vcmp.lt.s32.totalorder %v12, 0
  %v119 = vand.u32 %v12, 2139095040
  %v120 = vshrl.u32 %v119, 23
  %v121 = vsub.s32 %v120, 127
  %v122 = vand.u32 2147483647, %v12
  %v123 = vand.u32 %v122, 8388607
  %v124 = vor.u32 %v123, 8388608
  %v125 = vsub.s32 0, %v124
  %v126 = vadd.s32 %v121, 1
  %vm127 = vcmp.gt.s32.totalorder %v126, 0
  %v128 = vsel %vm127, %v126, 0
  %v129 = vshrl.u32 %v128, 5
  %v130 = vand.u32 %v128, 31
  %v131 = vsub.s32 32, %v130
  %v132 = vshrl.u32 683565275, %v131
  %v133 = vshll.u32 683565275, %v130
  %v134 = vshrl.u32 2475754826, %v131
  %v135 = vor.u32 %v133, %v134
  %v136 = vshll.u32 2475754826, %v130
  %v137 = vshrl.u32 2131351028, %v131
  %v138 = vor.u32 %v136, %v137
  %v139 = vshll.u32 2131351028, %v130
  %v140 = vshrl.u32 2102212464, %v131
  %v141 = vor.u32 %v139, %v140
  %v142 = vshll.u32 2102212464, %v130
  %v143 = vshrl.u32 920167782, %v131
  %v144 = vor.u32 %v142, %v143
  %v145 = vshll.u32 920167782, %v130
  %v146 = vshrl.u32 1326507024, %v131
  %v147 = vor.u32 %v145, %v146
  %vm148 = vcmp.lt.s32.totalorder %v129, 1
  %vm149 = vcmp.lt.s32.totalorder %v129, 2
  %vm150 = vcmp.lt.s32.totalorder %v129, 3
  %vm151 = vcmp.lt.s32.totalorder %v129, 4
  %v152 = vsel %vm148, %v132, %v135
  %v153 = vsel %vm151, %v141, 2102212464
  %v154 = vsel %vm150, %v138, %v153
  %v155 = vsel %vm149, %v152, %v154
  %v156 = vsel %vm148, %v135, %v138
  %v157 = vsel %vm151, %v144, 920167782
  %v158 = vsel %vm150, %v141, %v157
  %v159 = vsel %vm149, %v156, %v158
  %v160 = vsel %vm148, %v138, %v141
  %v161 = vsel %vm151, %v147, 1326507024
  %v162 = vsel %vm150, %v144, %v161
  %v163 = vsel %vm149, %v160, %v162
  %v164 = vshll.u32 %v124, 8
  %v165 = vmul.u32.u64.compose %v164, %v163
  %v166 = vextract.low.u32 %v165
  %v167 = vextract.high.u32 %v165
  %v168 = vmul.u32.u64.compose %v164, %v159
  %v169 = vextract.low.u32 %v168
  %v170 = vextract.high.u32 %v168
  %v171 = vmul.u32 %v164, %v155
  %v172 = vadd.s32 %v167, %v169
  %vm173 = vc.u32 %v167, %v169
  %v174 = vadd.s32 %v170, 1
  %v175 = vsel %vm173, %v174, %v170
  %v176 = vadd.s32 %v171, %v175
  %v177 = vadd.s32 %v176, 536870912
  %v178 = vshrl.u32 %v177, 30
  %v179 = vshll.u32 %v178, 30
  %v180 = vsub.s32 %v176, %v179
  %vm181 = vcmp.lt.s32.totalorder %v180, 0
  %v182 = vsub.s32 0, %v180
  %v183 = vsel %vm181, %v182, %v180
  %v184 = vclz %v183
  %v185 = vsub.s32 %v184, 2
  %vm186 = vcmp.gt.s32.totalorder 0, %v185
  %v187 = vsel %vm186, 0, %v185
  %v188 = vsub.s32 32, %v187
  %v189 = vshll.u32 %v180, %v187
  %v190 = vshrl.u32 %v172, %v188
  %v191 = vor.u32 %v189, %v190
  %v192 = vsub.s32 4294967266, %v187
  %v193 = vadd.s32 %v192, 127
  %v194 = vshll.u32 %v193, 23
  %v195 = vor.u32 4788187, %v194
  %v196 = vand.u32 2147483647, %v195
  %v198 = vcvt.s32.f32 %v191
  %v199 = vmul.f32 %v198, %v196
  %v200 = vxor.u32 %v199, 2147483648
  %v201 = vsel %vm118, %v200, %v199
  %v202 = vsub.s32 4, %v178
  %v203 = vsel %vm118, %v202, %v178
  %v204 = vsel %vm117, %v12, %v201
  %v205 = vsel %vm117, 0, %v203
  %v206 = vcosq.f32.pop %v204
  %v207 = vsinq.f32.pop %v204
  %vm208 = vweird.f32 %v12
  %v209 = vand.u32 %v205, 3
  %vm210 = vcmp.lt.s32.totalorder %v209, 2
  %vm211 = vcmp.eq.s32.totalorder %v209, 0
  %v212 = vxor.u32 %v207, 2147483648
  %v213 = vsel %vm211, %v206, %v212
  %vm214 = vcmp.eq.s32.totalorder %v209, 2
  %v215 = vxor.u32 %v206, 2147483648
  %v216 = vsel %vm214, %v215, %v207
  %v217 = vsel %vm210, %v213, %v216
  %v218 = vsel %vm208, nan, %v217
  %v219 = vmul.f32 %v8, %v115
  %v220 = vmul.f32 %v9, %v218
  %v221 = vand.u32 2147483647, %v8
  %vm222 = vcmp.le.f32.partialorder %v221, 0.7853982
  %vm223 = vcmp.lt.s32.totalorder %v8, 0
  %v224 = vand.u32 %v8, 2139095040
  %v225 = vshrl.u32 %v224, 23
  %v226 = vsub.s32 %v225, 127
  %v227 = vand.u32 2147483647, %v8
  %v228 = vand.u32 %v227, 8388607
  %v229 = vor.u32 %v228, 8388608
  %v230 = vsub.s32 0, %v229
  %v231 = vadd.s32 %v226, 1
  %vm232 = vcmp.gt.s32.totalorder %v231, 0
  %v233 = vsel %vm232, %v231, 0
  %v234 = vshrl.u32 %v233, 5
  %v235 = vand.u32 %v233, 31
  %v236 = vsub.s32 32, %v235
  %v237 = vshrl.u32 683565275, %v236
  %v238 = vshll.u32 683565275, %v235
  %v239 = vshrl.u32 2475754826, %v236
  %v240 = vor.u32 %v238, %v239
  %v241 = vshll.u32 2475754826, %v235
  %v242 = vshrl.u32 2131351028, %v236
  %v243 = vor.u32 %v241, %v242
  %v244 = vshll.u32 2131351028, %v235
  %v245 = vshrl.u32 2102212464, %v236
  %v246 = vor.u32 %v244, %v245
  %v247 = vshll.u32 2102212464, %v235
  %v248 = vshrl.u32 920167782, %v236
  %v249 = vor.u32 %v247, %v248
  %v250 = vshll.u32 920167782, %v235
  %v251 = vshrl.u32 1326507024, %v236
  %v252 = vor.u32 %v250, %v251
  %vm253 = vcmp.lt.s32.totalorder %v234, 1
  %vm254 = vcmp.lt.s32.totalorder %v234, 2
  %vm255 = vcmp.lt.s32.totalorder %v234, 3
  %vm256 = vcmp.lt.s32.totalorder %v234, 4
  %v257 = vsel %vm253, %v237, %v240
  %v258 = vsel %vm256, %v246, 2102212464
  %v259 = vsel %vm255, %v243, %v258
  %v260 = vsel %vm254, %v257, %v259
  %v261 = vsel %vm253, %v240, %v243
  %v262 = vsel %vm256, %v249, 920167782
  %v263 = vsel %vm255, %v246, %v262
  %v264 = vsel %vm254, %v261, %v263
  %v265 = vsel %vm253, %v243, %v246
  %v266 = vsel %vm256, %v252, 1326507024
  %v267 = vsel %vm255, %v249, %v266
  %v268 = vsel %vm254, %v265, %v267
  %v269 = vshll.u32 %v229, 8
  %v270 = vmul.u32.u64.compose %v269, %v268
  %v271 = vextract.low.u32 %v270
  %v272 = vextract.high.u32 %v270
  %v273 = vmul.u32.u64.compose %v269, %v264
  %v274 = vextract.low.u32 %v273
  %v275 = vextract.high.u32 %v273
  %v276 = vmul.u32 %v269, %v260
  %v277 = vadd.s32 %v272, %v274
  %vm278 = vc.u32 %v272, %v274
  %v279 = vadd.s32 %v275, 1
  %v280 = vsel %vm278, %v279, %v275
  %v281 = vadd.s32 %v276, %v280
  %v282 = vadd.s32 %v281, 536870912
  %v283 = vshrl.u32 %v282, 30
  %v284 = vshll.u32 %v283, 30
  %v285 = vsub.s32 %v281, %v284
  %vm286 = vcmp.lt.s32.totalorder %v285, 0
  %v287 = vsub.s32 0, %v285
  %v288 = vsel %vm286, %v287, %v285
  %v289 = vclz %v288
  %v290 = vsub.s32 %v289, 2
  %vm291 = vcmp.gt.s32.totalorder 0, %v290
  %v292 = vsel %vm291, 0, %v290
  %v293 = vsub.s32 32, %v292
  %v294 = vshll.u32 %v285, %v292
  %v295 = vshrl.u32 %v277, %v293
  %v296 = vor.u32 %v294, %v295
  %v297 = vsub.s32 4294967266, %v292
  %v298 = vadd.s32 %v297, 127
  %v299 = vshll.u32 %v298, 23
  %v300 = vor.u32 4788187, %v299
  %v301 = vand.u32 2147483647, %v300
  %v303 = vcvt.s32.f32 %v296
  %v304 = vmul.f32 %v303, %v301
  %v305 = vxor.u32 %v304, 2147483648
  %v306 = vsel %vm223, %v305, %v304
  %v307 = vsub.s32 4, %v283
  %v308 = vsel %vm223, %v307, %v283
  %v309 = vsel %vm222, %v8, %v306
  %v310 = vsel %vm222, 0, %v308
  %v311 = vcosq.f32.pop %v309
  %v312 = vsinq.f32.pop %v309
  %vm313 = vweird.f32 %v8
  %v314 = vadd.s32 %v310, 3
  %v315 = vand.u32 %v314, 3
  %vm316 = vcmp.lt.s32.totalorder %v315, 2
  %vm317 = vcmp.eq.s32.totalorder %v315, 0
  %v318 = vxor.u32 %v312, 2147483648
  %v319 = vsel %vm317, %v311, %v318
  %vm320 = vcmp.eq.s32.totalorder %v315, 2
  %v321 = vxor.u32 %v311, 2147483648
  %v322 = vsel %vm320, %v321, %v312
  %v323 = vsel %vm316, %v319, %v322
  %v324 = vsel %vm313, nan, %v323
  %v325 = vand.u32 2147483647, %v9
  %vm326 = vcmp.le.f32.partialorder %v325, 0.7853982
  %vm327 = vcmp.lt.s32.totalorder %v9, 0
  %v328 = vand.u32 %v9, 2139095040
  %v329 = vshrl.u32 %v328, 23
  %v330 = vsub.s32 %v329, 127
  %v331 = vand.u32 2147483647, %v9
  %v332 = vand.u32 %v331, 8388607
  %v333 = vor.u32 %v332, 8388608
  %v334 = vsub.s32 0, %v333
  %v335 = vadd.s32 %v330, 1
  %vm336 = vcmp.gt.s32.totalorder %v335, 0
  %v337 = vsel %vm336, %v335, 0
  %v338 = vshrl.u32 %v337, 5
  %v339 = vand.u32 %v337, 31
  %v340 = vsub.s32 32, %v339
  %v341 = vshrl.u32 683565275, %v340
  %v342 = vshll.u32 683565275, %v339
  %v343 = vshrl.u32 2475754826, %v340
  %v344 = vor.u32 %v342, %v343
  %v345 = vshll.u32 2475754826, %v339
  %v346 = vshrl.u32 2131351028, %v340
  %v347 = vor.u32 %v345, %v346
  %v348 = vshll.u32 2131351028, %v339
  %v349 = vshrl.u32 2102212464, %v340
  %v350 = vor.u32 %v348, %v349
  %v351 = vshll.u32 2102212464, %v339
  %v352 = vshrl.u32 920167782, %v340
  %v353 = vor.u32 %v351, %v352
  %v354 = vshll.u32 920167782, %v339
  %v355 = vshrl.u32 1326507024, %v340
  %v356 = vor.u32 %v354, %v355
  %vm357 = vcmp.lt.s32.totalorder %v338, 1
  %vm358 = vcmp.lt.s32.totalorder %v338, 2
  %vm359 = vcmp.lt.s32.totalorder %v338, 3
  %vm360 = vcmp.lt.s32.totalorder %v338, 4
  %v361 = vsel %vm357, %v341, %v344
  %v362 = vsel %vm360, %v350, 2102212464
  %v363 = vsel %vm359, %v347, %v362
  %v364 = vsel %vm358, %v361, %v363
  %v365 = vsel %vm357, %v344, %v347
  %v366 = vsel %vm360, %v353, 920167782
  %v367 = vsel %vm359, %v350, %v366
  %v368 = vsel %vm358, %v365, %v367
  %v369 = vsel %vm357, %v347, %v350
  %v370 = vsel %vm360, %v356, 1326507024
  %v371 = vsel %vm359, %v353, %v370
  %v372 = vsel %vm358, %v369, %v371
  %v373 = vshll.u32 %v333, 8
  %v374 = vmul.u32.u64.compose %v373, %v372
  %v375 = vextract.low.u32 %v374
  %v376 = vextract.high.u32 %v374
  %v377 = vmul.u32.u64.compose %v373, %v368
  %v378 = vextract.low.u32 %v377
  %v379 = vextract.high.u32 %v377
  %v380 = vmul.u32 %v373, %v364
  %v381 = vadd.s32 %v376, %v378
  %vm382 = vc.u32 %v376, %v378
  %v383 = vadd.s32 %v379, 1
  %v384 = vsel %vm382, %v383, %v379
  %v385 = vadd.s32 %v380, %v384
  %v386 = vadd.s32 %v385, 536870912
  %v387 = vshrl.u32 %v386, 30
  %v388 = vshll.u32 %v387, 30
  %v389 = vsub.s32 %v385, %v388
  %vm390 = vcmp.lt.s32.totalorder %v389, 0
  %v391 = vsub.s32 0, %v389
  %v392 = vsel %vm390, %v391, %v389
  %v393 = vclz %v392
  %v394 = vsub.s32 %v393, 2
  %vm395 = vcmp.gt.s32.totalorder 0, %v394
  %v396 = vsel %vm395, 0, %v394
  %v397 = vsub.s32 32, %v396
  %v398 = vshll.u32 %v389, %v396
  %v399 = vshrl.u32 %v381, %v397
  %v400 = vor.u32 %v398, %v399
  %v401 = vsub.s32 4294967266, %v396
  %v402 = vadd.s32 %v401, 127
  %v403 = vshll.u32 %v402, 23
  %v404 = vor.u32 4788187, %v403
  %v405 = vand.u32 2147483647, %v404
  %v407 = vcvt.s32.f32 %v400
  %v408 = vmul.f32 %v407, %v405
  %v409 = vxor.u32 %v408, 2147483648
  %v410 = vsel %vm327, %v409, %v408
  %v411 = vsub.s32 4, %v387
  %v412 = vsel %vm327, %v411, %v387
  %v413 = vsel %vm326, %v9, %v410
  %v414 = vsel %vm326, 0, %v412
  %v415 = vcosq.f32.pop %v413
  %v416 = vsinq.f32.pop %v413
  %vm417 = vweird.f32 %v9
  %v418 = vadd.s32 %v414, 3
  %v419 = vand.u32 %v418, 3
  %vm420 = vcmp.lt.s32.totalorder %v419, 2
  %vm421 = vcmp.eq.s32.totalorder %v419, 0
  %v422 = vxor.u32 %v416, 2147483648
  %v423 = vsel %vm421, %v415, %v422
  %vm424 = vcmp.eq.s32.totalorder %v419, 2
  %v425 = vxor.u32 %v415, 2147483648
  %v426 = vsel %vm424, %v425, %v416
  %v427 = vsel %vm420, %v423, %v426
  %v428 = vsel %vm417, nan, %v427
  %v429 = vmul.f32 %v11, %v324
  %v430 = vmul.f32 %v12, %v428
  %v431 = vsub.f32 %v219, %v429
  %v432 = vsub.f32 %v220, %v430
  %433 = vst [vmem:[%s1] sm:$0xff] %v431
  %434 = vst [vmem:[%s1 + $0x8] sm:$0xff] %v432
  %v435 = vand.u32 2147483647, %v11
  %vm436 = vcmp.le.f32.partialorder %v435, 0.7853982
  %vm437 = vcmp.lt.s32.totalorder %v11, 0
  %v438 = vand.u32 %v11, 2139095040
  %v439 = vshrl.u32 %v438, 23
  %v440 = vsub.s32 %v439, 127
  %v441 = vand.u32 2147483647, %v11
  %v442 = vand.u32 %v441, 8388607
  %v443 = vor.u32 %v442, 8388608
  %v444 = vsub.s32 0, %v443
  %v445 = vadd.s32 %v440, 1
  %vm446 = vcmp.gt.s32.totalorder %v445, 0
  %v447 = vsel %vm446, %v445, 0
  %v448 = vshrl.u32 %v447, 5
  %v449 = vand.u32 %v447, 31
  %v450 = vsub.s32 32, %v449
  %v451 = vshrl.u32 683565275, %v450
  %v452 = vshll.u32 683565275, %v449
  %v453 = vshrl.u32 2475754826, %v450
  %v454 = vor.u32 %v452, %v453
  %v455 = vshll.u32 2475754826, %v449
  %v456 = vshrl.u32 2131351028, %v450
  %v457 = vor.u32 %v455, %v456
  %v458 = vshll.u32 2131351028, %v449
  %v459 = vshrl.u32 2102212464, %v450
  %v460 = vor.u32 %v458, %v459
  %v461 = vshll.u32 2102212464, %v449
  %v462 = vshrl.u32 920167782, %v450
  %v463 = vor.u32 %v461, %v462
  %v464 = vshll.u32 920167782, %v449
  %v465 = vshrl.u32 1326507024, %v450
  %v466 = vor.u32 %v464, %v465
  %vm467 = vcmp.lt.s32.totalorder %v448, 1
  %vm468 = vcmp.lt.s32.totalorder %v448, 2
  %vm469 = vcmp.lt.s32.totalorder %v448, 3
  %vm470 = vcmp.lt.s32.totalorder %v448, 4
  %v471 = vsel %vm467, %v451, %v454
  %v472 = vsel %vm470, %v460, 2102212464
  %v473 = vsel %vm469, %v457, %v472
  %v474 = vsel %vm468, %v471, %v473
  %v475 = vsel %vm467, %v454, %v457
  %v476 = vsel %vm470, %v463, 920167782
  %v477 = vsel %vm469, %v460, %v476
  %v478 = vsel %vm468, %v475, %v477
  %v479 = vsel %vm467, %v457, %v460
  %v480 = vsel %vm470, %v466, 1326507024
  %v481 = vsel %vm469, %v463, %v480
  %v482 = vsel %vm468, %v479, %v481
  %v483 = vshll.u32 %v443, 8
  %v484 = vmul.u32.u64.compose %v483, %v482
  %v485 = vextract.low.u32 %v484
  %v486 = vextract.high.u32 %v484
  %v487 = vmul.u32.u64.compose %v483, %v478
  %v488 = vextract.low.u32 %v487
  %v489 = vextract.high.u32 %v487
  %v490 = vmul.u32 %v483, %v474
  %v491 = vadd.s32 %v486, %v488
  %vm492 = vc.u32 %v486, %v488
  %v493 = vadd.s32 %v489, 1
  %v494 = vsel %vm492, %v493, %v489
  %v495 = vadd.s32 %v490, %v494
  %v496 = vadd.s32 %v495, 536870912
  %v497 = vshrl.u32 %v496, 30
  %v498 = vshll.u32 %v497, 30
  %v499 = vsub.s32 %v495, %v498
  %vm500 = vcmp.lt.s32.totalorder %v499, 0
  %v501 = vsub.s32 0, %v499
  %v502 = vsel %vm500, %v501, %v499
  %v503 = vclz %v502
  %v504 = vsub.s32 %v503, 2
  %vm505 = vcmp.gt.s32.totalorder 0, %v504
  %v506 = vsel %vm505, 0, %v504
  %v507 = vsub.s32 32, %v506
  %v508 = vshll.u32 %v499, %v506
  %v509 = vshrl.u32 %v491, %v507
  %v510 = vor.u32 %v508, %v509
  %v511 = vsub.s32 4294967266, %v506
  %v512 = vadd.s32 %v511, 127
  %v513 = vshll.u32 %v512, 23
  %v514 = vor.u32 4788187, %v513
  %v515 = vand.u32 2147483647, %v514
  %v517 = vcvt.s32.f32 %v510
  %v518 = vmul.f32 %v517, %v515
  %v519 = vxor.u32 %v518, 2147483648
  %v520 = vsel %vm437, %v519, %v518
  %v521 = vsub.s32 4, %v497
  %v522 = vsel %vm437, %v521, %v497
  %v523 = vsel %vm436, %v11, %v520
  %v524 = vsel %vm436, 0, %v522
  %v525 = vcosq.f32.pop %v523
  %v526 = vsinq.f32.pop %v523
  %vm527 = vweird.f32 %v11
  %v528 = vadd.s32 %v524, 3
  %v529 = vand.u32 %v528, 3
  %vm530 = vcmp.lt.s32.totalorder %v529, 2
  %vm531 = vcmp.eq.s32.totalorder %v529, 0
  %v532 = vxor.u32 %v526, 2147483648
  %v533 = vsel %vm531, %v525, %v532
  %vm534 = vcmp.eq.s32.totalorder %v529, 2
  %v535 = vxor.u32 %v525, 2147483648
  %v536 = vsel %vm534, %v535, %v526
  %v537 = vsel %vm530, %v533, %v536
  %v538 = vsel %vm527, nan, %v537
  %v539 = vand.u32 2147483647, %v12
  %vm540 = vcmp.le.f32.partialorder %v539, 0.7853982
  %vm541 = vcmp.lt.s32.totalorder %v12, 0
  %v542 = vand.u32 %v12, 2139095040
  %v543 = vshrl.u32 %v542, 23
  %v544 = vsub.s32 %v543, 127
  %v545 = vand.u32 2147483647, %v12
  %v546 = vand.u32 %v545, 8388607
  %v547 = vor.u32 %v546, 8388608
  %v548 = vsub.s32 0, %v547
  %v549 = vadd.s32 %v544, 1
  %vm550 = vcmp.gt.s32.totalorder %v549, 0
  %v551 = vsel %vm550, %v549, 0
  %v552 = vshrl.u32 %v551, 5
  %v553 = vand.u32 %v551, 31
  %v554 = vsub.s32 32, %v553
  %v555 = vshrl.u32 683565275, %v554
  %v556 = vshll.u32 683565275, %v553
  %v557 = vshrl.u32 2475754826, %v554
  %v558 = vor.u32 %v556, %v557
  %v559 = vshll.u32 2475754826, %v553
  %v560 = vshrl.u32 2131351028, %v554
  %v561 = vor.u32 %v559, %v560
  %v562 = vshll.u32 2131351028, %v553
  %v563 = vshrl.u32 2102212464, %v554
  %v564 = vor.u32 %v562, %v563
  %v565 = vshll.u32 2102212464, %v553
  %v566 = vshrl.u32 920167782, %v554
  %v567 = vor.u32 %v565, %v566
  %v568 = vshll.u32 920167782, %v553
  %v569 = vshrl.u32 1326507024, %v554
  %v570 = vor.u32 %v568, %v569
  %vm571 = vcmp.lt.s32.totalorder %v552, 1
  %vm572 = vcmp.lt.s32.totalorder %v552, 2
  %vm573 = vcmp.lt.s32.totalorder %v552, 3
  %vm574 = vcmp.lt.s32.totalorder %v552, 4
  %v575 = vsel %vm571, %v555, %v558
  %v576 = vsel %vm574, %v564, 2102212464
  %v577 = vsel %vm573, %v561, %v576
  %v578 = vsel %vm572, %v575, %v577
  %v579 = vsel %vm571, %v558, %v561
  %v580 = vsel %vm574, %v567, 920167782
  %v581 = vsel %vm573, %v564, %v580
  %v582 = vsel %vm572, %v579, %v581
  %v583 = vsel %vm571, %v561, %v564
  %v584 = vsel %vm574, %v570, 1326507024
  %v585 = vsel %vm573, %v567, %v584
  %v586 = vsel %vm572, %v583, %v585
  %v587 = vshll.u32 %v547, 8
  %v588 = vmul.u32.u64.compose %v587, %v586
  %v589 = vextract.low.u32 %v588
  %v590 = vextract.high.u32 %v588
  %v591 = vmul.u32.u64.compose %v587, %v582
  %v592 = vextract.low.u32 %v591
  %v593 = vextract.high.u32 %v591
  %v594 = vmul.u32 %v587, %v578
  %v595 = vadd.s32 %v590, %v592
  %vm596 = vc.u32 %v590, %v592
  %v597 = vadd.s32 %v593, 1
  %v598 = vsel %vm596, %v597, %v593
  %v599 = vadd.s32 %v594, %v598
  %v600 = vadd.s32 %v599, 536870912
  %v601 = vshrl.u32 %v600, 30
  %v602 = vshll.u32 %v601, 30
  %v603 = vsub.s32 %v599, %v602
  %vm604 = vcmp.lt.s32.totalorder %v603, 0
  %v605 = vsub.s32 0, %v603
  %v606 = vsel %vm604, %v605, %v603
  %v607 = vclz %v606
  %v608 = vsub.s32 %v607, 2
  %vm609 = vcmp.gt.s32.totalorder 0, %v608
  %v610 = vsel %vm609, 0, %v608
  %v611 = vsub.s32 32, %v610
  %v612 = vshll.u32 %v603, %v610
  %v613 = vshrl.u32 %v595, %v611
  %v614 = vor.u32 %v612, %v613
  %v615 = vsub.s32 4294967266, %v610
  %v616 = vadd.s32 %v615, 127
  %v617 = vshll.u32 %v616, 23
  %v618 = vor.u32 4788187, %v617
  %v619 = vand.u32 2147483647, %v618
  %v621 = vcvt.s32.f32 %v614
  %v622 = vmul.f32 %v621, %v619
  %v623 = vxor.u32 %v622, 2147483648
  %v624 = vsel %vm541, %v623, %v622
  %v625 = vsub.s32 4, %v601
  %v626 = vsel %vm541, %v625, %v601
  %v627 = vsel %vm540, %v12, %v624
  %v628 = vsel %vm540, 0, %v626
  %v629 = vcosq.f32.pop %v627
  %v630 = vsinq.f32.pop %v627
  %vm631 = vweird.f32 %v12
  %v632 = vadd.s32 %v628, 3
  %v633 = vand.u32 %v632, 3
  %vm634 = vcmp.lt.s32.totalorder %v633, 2
  %vm635 = vcmp.eq.s32.totalorder %v633, 0
  %v636 = vxor.u32 %v630, 2147483648
  %v637 = vsel %vm635, %v629, %v636
  %vm638 = vcmp.eq.s32.totalorder %v633, 2
  %v639 = vxor.u32 %v629, 2147483648
  %v640 = vsel %vm638, %v639, %v630
  %v641 = vsel %vm634, %v637, %v640
  %v642 = vsel %vm631, nan, %v641
  %v643 = vmul.f32 %v8, %v538
  %v644 = vmul.f32 %v9, %v642
  %v645 = vand.u32 2147483647, %v8
  %vm646 = vcmp.le.f32.partialorder %v645, 0.7853982
  %vm647 = vcmp.lt.s32.totalorder %v8, 0
  %v648 = vand.u32 %v8, 2139095040
  %v649 = vshrl.u32 %v648, 23
  %v650 = vsub.s32 %v649, 127
  %v651 = vand.u32 2147483647, %v8
  %v652 = vand.u32 %v651, 8388607
  %v653 = vor.u32 %v652, 8388608
  %v654 = vsub.s32 0, %v653
  %v655 = vadd.s32 %v650, 1
  %vm656 = vcmp.gt.s32.totalorder %v655, 0
  %v657 = vsel %vm656, %v655, 0
  %v658 = vshrl.u32 %v657, 5
  %v659 = vand.u32 %v657, 31
  %v660 = vsub.s32 32, %v659
  %v661 = vshrl.u32 683565275, %v660
  %v662 = vshll.u32 683565275, %v659
  %v663 = vshrl.u32 2475754826, %v660
  %v664 = vor.u32 %v662, %v663
  %v665 = vshll.u32 2475754826, %v659
  %v666 = vshrl.u32 2131351028, %v660
  %v667 = vor.u32 %v665, %v666
  %v668 = vshll.u32 2131351028, %v659
  %v669 = vshrl.u32 2102212464, %v660
  %v670 = vor.u32 %v668, %v669
  %v671 = vshll.u32 2102212464, %v659
  %v672 = vshrl.u32 920167782, %v660
  %v673 = vor.u32 %v671, %v672
  %v674 = vshll.u32 920167782, %v659
  %v675 = vshrl.u32 1326507024, %v660
  %v676 = vor.u32 %v674, %v675
  %vm677 = vcmp.lt.s32.totalorder %v658, 1
  %vm678 = vcmp.lt.s32.totalorder %v658, 2
  %vm679 = vcmp.lt.s32.totalorder %v658, 3
  %vm680 = vcmp.lt.s32.totalorder %v658, 4
  %v681 = vsel %vm677, %v661, %v664
  %v682 = vsel %vm680, %v670, 2102212464
  %v683 = vsel %vm679, %v667, %v682
  %v684 = vsel %vm678, %v681, %v683
  %v685 = vsel %vm677, %v664, %v667
  %v686 = vsel %vm680, %v673, 920167782
  %v687 = vsel %vm679, %v670, %v686
  %v688 = vsel %vm678, %v685, %v687
  %v689 = vsel %vm677, %v667, %v670
  %v690 = vsel %vm680, %v676, 1326507024
  %v691 = vsel %vm679, %v673, %v690
  %v692 = vsel %vm678, %v689, %v691
  %v693 = vshll.u32 %v653, 8
  %v694 = vmul.u32.u64.compose %v693, %v692
  %v695 = vextract.low.u32 %v694
  %v696 = vextract.high.u32 %v694
  %v697 = vmul.u32.u64.compose %v693, %v688
  %v698 = vextract.low.u32 %v697
  %v699 = vextract.high.u32 %v697
  %v700 = vmul.u32 %v693, %v684
  %v701 = vadd.s32 %v696, %v698
  %vm702 = vc.u32 %v696, %v698
  %v703 = vadd.s32 %v699, 1
  %v704 = vsel %vm702, %v703, %v699
  %v705 = vadd.s32 %v700, %v704
  %v706 = vadd.s32 %v705, 536870912
  %v707 = vshrl.u32 %v706, 30
  %v708 = vshll.u32 %v707, 30
  %v709 = vsub.s32 %v705, %v708
  %vm710 = vcmp.lt.s32.totalorder %v709, 0
  %v711 = vsub.s32 0, %v709
  %v712 = vsel %vm710, %v711, %v709
  %v713 = vclz %v712
  %v714 = vsub.s32 %v713, 2
  %vm715 = vcmp.gt.s32.totalorder 0, %v714
  %v716 = vsel %vm715, 0, %v714
  %v717 = vsub.s32 32, %v716
  %v718 = vshll.u32 %v709, %v716
  %v719 = vshrl.u32 %v701, %v717
  %v720 = vor.u32 %v718, %v719
  %v721 = vsub.s32 4294967266, %v716
  %v722 = vadd.s32 %v721, 127
  %v723 = vshll.u32 %v722, 23
  %v724 = vor.u32 4788187, %v723
  %v725 = vand.u32 2147483647, %v724
  %v727 = vcvt.s32.f32 %v720
  %v728 = vmul.f32 %v727, %v725
  %v729 = vxor.u32 %v728, 2147483648
  %v730 = vsel %vm647, %v729, %v728
  %v731 = vsub.s32 4, %v707
  %v732 = vsel %vm647, %v731, %v707
  %v733 = vsel %vm646, %v8, %v730
  %v734 = vsel %vm646, 0, %v732
  %v735 = vcosq.f32.pop %v733
  %v736 = vsinq.f32.pop %v733
  %vm737 = vweird.f32 %v8
  %v738 = vand.u32 %v734, 3
  %vm739 = vcmp.lt.s32.totalorder %v738, 2
  %vm740 = vcmp.eq.s32.totalorder %v738, 0
  %v741 = vxor.u32 %v736, 2147483648
  %v742 = vsel %vm740, %v735, %v741
  %vm743 = vcmp.eq.s32.totalorder %v738, 2
  %v744 = vxor.u32 %v735, 2147483648
  %v745 = vsel %vm743, %v744, %v736
  %v746 = vsel %vm739, %v742, %v745
  %v747 = vsel %vm737, nan, %v746
  %v748 = vand.u32 2147483647, %v9
  %vm749 = vcmp.le.f32.partialorder %v748, 0.7853982
  %vm750 = vcmp.lt.s32.totalorder %v9, 0
  %v751 = vand.u32 %v9, 2139095040
  %v752 = vshrl.u32 %v751, 23
  %v753 = vsub.s32 %v752, 127
  %v754 = vand.u32 2147483647, %v9
  %v755 = vand.u32 %v754, 8388607
  %v756 = vor.u32 %v755, 8388608
  %v757 = vsub.s32 0, %v756
  %v758 = vadd.s32 %v753, 1
  %vm759 = vcmp.gt.s32.totalorder %v758, 0
  %v760 = vsel %vm759, %v758, 0
  %v761 = vshrl.u32 %v760, 5
  %v762 = vand.u32 %v760, 31
  %v763 = vsub.s32 32, %v762
  %v764 = vshrl.u32 683565275, %v763
  %v765 = vshll.u32 683565275, %v762
  %v766 = vshrl.u32 2475754826, %v763
  %v767 = vor.u32 %v765, %v766
  %v768 = vshll.u32 2475754826, %v762
  %v769 = vshrl.u32 2131351028, %v763
  %v770 = vor.u32 %v768, %v769
  %v771 = vshll.u32 2131351028, %v762
  %v772 = vshrl.u32 2102212464, %v763
  %v773 = vor.u32 %v771, %v772
  %v774 = vshll.u32 2102212464, %v762
  %v775 = vshrl.u32 920167782, %v763
  %v776 = vor.u32 %v774, %v775
  %v777 = vshll.u32 920167782, %v762
  %v778 = vshrl.u32 1326507024, %v763
  %v779 = vor.u32 %v777, %v778
  %vm780 = vcmp.lt.s32.totalorder %v761, 1
  %vm781 = vcmp.lt.s32.totalorder %v761, 2
  %vm782 = vcmp.lt.s32.totalorder %v761, 3
  %vm783 = vcmp.lt.s32.totalorder %v761, 4
  %v784 = vsel %vm780, %v764, %v767
  %v785 = vsel %vm783, %v773, 2102212464
  %v786 = vsel %vm782, %v770, %v785
  %v787 = vsel %vm781, %v784, %v786
  %v788 = vsel %vm780, %v767, %v770
  %v789 = vsel %vm783, %v776, 920167782
  %v790 = vsel %vm782, %v773, %v789
  %v791 = vsel %vm781, %v788, %v790
  %v792 = vsel %vm780, %v770, %v773
  %v793 = vsel %vm783, %v779, 1326507024
  %v794 = vsel %vm782, %v776, %v793
  %v795 = vsel %vm781, %v792, %v794
  %v796 = vshll.u32 %v756, 8
  %v797 = vmul.u32.u64.compose %v796, %v795
  %v798 = vextract.low.u32 %v797
  %v799 = vextract.high.u32 %v797
  %v800 = vmul.u32.u64.compose %v796, %v791
  %v801 = vextract.low.u32 %v800
  %v802 = vextract.high.u32 %v800
  %v803 = vmul.u32 %v796, %v787
  %v804 = vadd.s32 %v799, %v801
  %vm805 = vc.u32 %v799, %v801
  %v806 = vadd.s32 %v802, 1
  %v807 = vsel %vm805, %v806, %v802
  %v808 = vadd.s32 %v803, %v807
  %v809 = vadd.s32 %v808, 536870912
  %v810 = vshrl.u32 %v809, 30
  %v811 = vshll.u32 %v810, 30
  %v812 = vsub.s32 %v808, %v811
  %vm813 = vcmp.lt.s32.totalorder %v812, 0
  %v814 = vsub.s32 0, %v812
  %v815 = vsel %vm813, %v814, %v812
  %v816 = vclz %v815
  %v817 = vsub.s32 %v816, 2
  %vm818 = vcmp.gt.s32.totalorder 0, %v817
  %v819 = vsel %vm818, 0, %v817
  %v820 = vsub.s32 32, %v819
  %v821 = vshll.u32 %v812, %v819
  %v822 = vshrl.u32 %v804, %v820
  %v823 = vor.u32 %v821, %v822
  %v824 = vsub.s32 4294967266, %v819
  %v825 = vadd.s32 %v824, 127
  %v826 = vshll.u32 %v825, 23
  %v827 = vor.u32 4788187, %v826
  %v828 = vand.u32 2147483647, %v827
  %v830 = vcvt.s32.f32 %v823
  %v831 = vmul.f32 %v830, %v828
  %v832 = vxor.u32 %v831, 2147483648
  %v833 = vsel %vm750, %v832, %v831
  %v834 = vsub.s32 4, %v810
  %v835 = vsel %vm750, %v834, %v810
  %v836 = vsel %vm749, %v9, %v833
  %v837 = vsel %vm749, 0, %v835
  %v838 = vcosq.f32.pop %v836
  %v839 = vsinq.f32.pop %v836
  %vm840 = vweird.f32 %v9
  %v841 = vand.u32 %v837, 3
  %vm842 = vcmp.lt.s32.totalorder %v841, 2
  %vm843 = vcmp.eq.s32.totalorder %v841, 0
  %v844 = vxor.u32 %v839, 2147483648
  %v845 = vsel %vm843, %v838, %v844
  %vm846 = vcmp.eq.s32.totalorder %v841, 2
  %v847 = vxor.u32 %v838, 2147483648
  %v848 = vsel %vm846, %v847, %v839
  %v849 = vsel %vm842, %v845, %v848
  %v850 = vsel %vm840, nan, %v849
  %v851 = vmul.f32 %v11, %v747
  %v852 = vmul.f32 %v12, %v850
  %v853 = vadd.f32 %v643, %v851
  %v854 = vadd.f32 %v644, %v852
  %s855 = scalar_lea.vmem %s1, 16
  %856 = vst [vmem:[%s855] sm:$0xff] %v853
  %857 = vst [vmem:[%s855 + $0x8] sm:$0xff] %v854
  // Predicated region
  $region6: #{cardioid_split.1} parent=0 // pred_check
    _
  $region7: #{cardioid_split.1} parent=0 // pred_check_branch
    %859 = sbr.rel (0) target = $region9
  $region8: #{cardioid_split.1} parent=0 // pred_region
    _
  $region9: #{cardioid_split.1} parent=0 // pred_fallthru
    _
  // Predicated region
  $region10: #{cardioid_split.1} parent=0 // pred_check
    _
  $region11: #{cardioid_split.1} parent=0 // pred_check_branch
    %861 = sbr.rel (0) target = $region13
  $region12: #{cardioid_split.1} parent=0 // pred_region
    _
  $region13: #{cardioid_split.1} parent=0 // pred_fallthru
    _

</llo_original>
